<compile_context>
chip_gen: v5e
topology: v5e:2x2
jax: 0.10.0
libtpu: 0.0.40
codegen_flags: <defaults>
</compile_context>

<pallas_src>
import numpy as np
import jax
import jax.numpy as jnp
from jax.experimental import pallas as pl
from jax.experimental.pallas import tpu as pltpu


def _span_meta(sentence_size, max_span_length):
    """Span count + human-readable ranges (mirrors the torch double loop)."""
    ranges = []
    for span_length in range(1, max_span_length + 1):
        start_idx, end_idx = 1, span_length
        for i in range(sentence_size - span_length):
            ranges.append(f"{start_idx + i - 1}-{end_idx + i - 1}")
    return len(ranges), ranges


def _choose_batch_tile(B, max_bt=8):
    """Largest divisor of B that is <= max_bt and still leaves >=2 grid steps
    (so the 'parallel' grid axis can use both v7x TensorCores)."""
    bt = min(max_bt, B)
    while bt > 1 and (B % bt != 0 or B // bt < 2):
        bt -= 1
    return max(bt, 1)


def _make_span_kernel(S, M, D, Bt, MD_pad, dtype):
    MD = M * D
    nS = S - 1                      # staircase rows (= number of length-1 spans)

    def kernel(x_ref, o_ref, stair_ref):
        # stair_ref: (Bt, S+M-1, D) zero-padded copy of this step's inputs.
        # The padded rows provably never reach the output (the lane mask zeroes
        # every lane that would read them), but zero them anyway: VMEM scratch
        # is not zero-initialised and persists across grid steps.
        if M > 1:
            stair_ref[:, pl.ds(S, M - 1), :] = jnp.zeros((Bt, M - 1, D), dtype)
        stair_ref[:, pl.ds(0, S), :] = x_ref[...]

        # Build the shifted-column staircase ONCE: lane slab j of every group
        # block is the static contiguous slice x[:, 1+j : 1+j+(S-1), :].
        slabs = [stair_ref[:, pl.ds(1 + j, nS), :] for j in range(M)]
        if MD_pad > MD:                                    # lane-density padding
            slabs.append(jnp.zeros((Bt, nS, MD_pad - MD), dtype))
        stair = jnp.concatenate(slabs, axis=-1)            # (Bt, S-1, MD_pad)

        # Hoisted lane index (JAX does not CSE broadcast_in_dim).
        lane = jax.lax.broadcasted_iota(jnp.int32, (1, 1, MD_pad), 2)

        # Group L = first (S-L) staircase rows with lanes >= L*D zeroed (VPU
        # select). Assemble every group and store the whole block in one shot
        # so Mosaic emits full-tile, unmasked vector stores for the output.
        groups = []
        for L in range(1, M + 1):
            nL = S - L
            if nL <= 0:
                continue
            groups.append(jnp.where(lane < L * D, stair[:, :nL, :], 0))
        o_ref[...] = jnp.concatenate(groups, axis=1).astype(o_ref.dtype)

    return kernel


def span_generator(x, max_span_length=8):
    B, S, D = x.shape
    M = max_span_length
    N, span_ranges = _span_meta(S, M)
    MD = M * D
    MD_pad = ((MD + 127) // 128) * 128     # keep output rows lane-dense
    Bt = _choose_batch_tile(B)

    out = pl.pallas_call(
        _make_span_kernel(S, M, D, Bt, MD_pad, x.dtype),
        out_shape=jax.ShapeDtypeStruct((B, N, MD_pad), x.dtype),
        grid_spec=pltpu.PrefetchScalarGridSpec(
            num_scalar_prefetch=0,
            grid=(B // Bt,),
            in_specs=[pl.BlockSpec((Bt, S, D), lambda b: (b, 0, 0))],
            out_specs=pl.BlockSpec((Bt, N, MD_pad), lambda b: (b, 0, 0)),
            scratch_shapes=[pltpu.VMEM((Bt, S + M - 1, D), x.dtype)]),
        compiler_params=pltpu.CompilerParams(
            dimension_semantics=("parallel",)),
        cost_estimate=pl.CostEstimate(
            flops=0,
            transcendentals=0,
            bytes_accessed=B * (S * D + N * MD_pad) * x.dtype.itemsize),
    )(x)
    # TODO(synk): for large S*D (v7x: 64 MiB VMEM / 32 MiB scoped default) add
    # an N-tiled grid axis over the span-length groups (natural tile edges,
    # keep tiles >=512 rows x full M*D lanes on v6e) and set vmem_limit_bytes;
    # unnecessary at these shapes (per-step output block is ~92 KiB).
    if MD_pad != MD:
        out = out[..., :MD]
    return out, span_ranges


def _reference(x_np, max_span_length):
    """Pure numpy port of the torch forward pass for verification."""
    B, S, D = x_np.shape
    M = max_span_length
    outs = []
    for b in range(B):
        spans = []
        for L in range(1, M + 1):
            for i in range(S - L):
                sp = x_np[b, 1 + i:L + i + 1, :]
                sp = np.pad(sp, ((0, M - L), (0, 0)))
                spans.append(sp.reshape(-1))
        outs.append(np.stack(spans))
    return np.stack(outs)


if __name__ == "__main__":
    B, S, D = 2, 16, 32
    MAX_SPAN = 8

    key = jax.random.PRNGKey(0)
    x = jax.random.normal(key, (B, S, D), dtype=jnp.float32)

    out, span_ranges = span_generator(x, max_span_length=MAX_SPAN)
    out = jax.block_until_ready(out)

    ref = _reference(np.asarray(x), MAX_SPAN)
    assert out.shape == ref.shape, (out.shape, ref.shape)
    np.testing.assert_allclose(np.asarray(out), ref, rtol=1e-6, atol=1e-6)
    assert len(span_ranges) == out.shape[1]

    print("KERNEL_OK")
</pallas_src>

<mosaic_0001>
module attributes {stable_mosaic.version = 11 : i64} {
  func.func @kernel(%arg0: i32, %arg1: memref<1x16x32xf32, #tpu.memory_space<vmem>>, %arg2: memref<1x92x256xf32, #tpu.memory_space<vmem>>, %arg3: memref<1x23x32xf32, #tpu.memory_space<vmem>>) attributes {dimension_semantics = [#tpu.dimension_semantics<parallel>], iteration_bounds = array<i64: 2>, scalar_prefetch = 0 : i64, scratch_operands = 1 : i64, tpu.core_type = #tpu.core_type<tc>, window_params = [{transform_indices = @transform_0, window_bounds = array<i64: 1, 16, 32>}, {transform_indices = @transform_1, window_bounds = array<i64: 1, 92, 256>}]} {
    %cst = arith.constant 0.000000e+00 : f32
    %0 = vector.broadcast %cst : f32 to vector<1x7x32xf32>
    %c0 = arith.constant 0 : index
    %c16 = arith.constant 16 : index
    %c0_0 = arith.constant 0 : index
    %1 = vector.load %arg3[%c0, %c16, %c0_0] : memref<1x23x32xf32, #tpu.memory_space<vmem>>, vector<1x7x32xf32>
    tpu.vector_store %arg3[%c0, %c16, %c0_0], %0 {strides = array<i32>} : memref<1x23x32xf32, #tpu.memory_space<vmem>>, vector<1x7x32xf32>,
    %c0_1 = arith.constant 0 : index
    %c0_2 = arith.constant 0 : index
    %c0_3 = arith.constant 0 : index
    %2 = vector.load %arg1[%c0_1, %c0_2, %c0_3] : memref<1x16x32xf32, #tpu.memory_space<vmem>>, vector<1x16x32xf32>
    %c0_4 = arith.constant 0 : index
    %c0_5 = arith.constant 0 : index
    %c0_6 = arith.constant 0 : index
    %3 = vector.load %arg3[%c0_4, %c0_5, %c0_6] : memref<1x23x32xf32, #tpu.memory_space<vmem>>, vector<1x16x32xf32>
    tpu.vector_store %arg3[%c0_4, %c0_5, %c0_6], %2 {strides = array<i32>} : memref<1x23x32xf32, #tpu.memory_space<vmem>>, vector<1x16x32xf32>,
    %c0_7 = arith.constant 0 : index
    %c1 = arith.constant 1 : index
    %c0_8 = arith.constant 0 : index
    %4 = vector.load %arg3[%c0_7, %c1, %c0_8] : memref<1x23x32xf32, #tpu.memory_space<vmem>>, vector<1x15x32xf32>
    %c0_9 = arith.constant 0 : index
    %c2 = arith.constant 2 : index
    %c0_10 = arith.constant 0 : index
    %5 = vector.load %arg3[%c0_9, %c2, %c0_10] : memref<1x23x32xf32, #tpu.memory_space<vmem>>, vector<1x15x32xf32>
    %c0_11 = arith.constant 0 : index
    %c3 = arith.constant 3 : index
    %c0_12 = arith.constant 0 : index
    %6 = vector.load %arg3[%c0_11, %c3, %c0_12] : memref<1x23x32xf32, #tpu.memory_space<vmem>>, vector<1x15x32xf32>
    %c0_13 = arith.constant 0 : index
    %c4 = arith.constant 4 : index
    %c0_14 = arith.constant 0 : index
    %7 = vector.load %arg3[%c0_13, %c4, %c0_14] : memref<1x23x32xf32, #tpu.memory_space<vmem>>, vector<1x15x32xf32>
    %c0_15 = arith.constant 0 : index
    %c5 = arith.constant 5 : index
    %c0_16 = arith.constant 0 : index
    %8 = vector.load %arg3[%c0_15, %c5, %c0_16] : memref<1x23x32xf32, #tpu.memory_space<vmem>>, vector<1x15x32xf32>
    %c0_17 = arith.constant 0 : index
    %c6 = arith.constant 6 : index
    %c0_18 = arith.constant 0 : index
    %9 = vector.load %arg3[%c0_17, %c6, %c0_18] : memref<1x23x32xf32, #tpu.memory_space<vmem>>, vector<1x15x32xf32>
    %c0_19 = arith.constant 0 : index
    %c7 = arith.constant 7 : index
    %c0_20 = arith.constant 0 : index
    %10 = vector.load %arg3[%c0_19, %c7, %c0_20] : memref<1x23x32xf32, #tpu.memory_space<vmem>>, vector<1x15x32xf32>
    %c0_21 = arith.constant 0 : index
    %c8 = arith.constant 8 : index
    %c0_22 = arith.constant 0 : index
    %11 = vector.load %arg3[%c0_21, %c8, %c0_22] : memref<1x23x32xf32, #tpu.memory_space<vmem>>, vector<1x15x32xf32>
    %12 = tpu.concatenate %4, %5, %6, %7, %8, %9, %10, %11 in 2 : vector<1x15x32xf32>, vector<1x15x32xf32>, vector<1x15x32xf32>, vector<1x15x32xf32>, vector<1x15x32xf32>, vector<1x15x32xf32>, vector<1x15x32xf32>, vector<1x15x32xf32> -> vector<1x15x256xf32>
    %13 = tpu.iota {dimensions = array<i32: 2>} : vector<1x1x256xi32>
    %c32_i32 = arith.constant 32 : i32
    %14 = vector.broadcast %c32_i32 : i32 to vector<1x1x256xi32>
    %15 = arith.cmpi slt, %13, %14 : vector<1x1x256xi32>
    %c0_i32 = arith.constant 0 : i32
    %16 = arith.sitofp %c0_i32 : i32 to f32
    %17 = vector.shape_cast %15 : vector<1x1x256xi1> to vector<1x1x256xi1>
    %18 = vector.broadcast %17 : vector<1x1x256xi1> to vector<1x15x256xi1>
    %19 = vector.broadcast %16 : f32 to vector<1x15x256xf32>
    %20 = arith.select %18, %12, %19 : vector<1x15x256xi1>, vector<1x15x256xf32>
    %c64_i32 = arith.constant 64 : i32
    %21 = vector.broadcast %c64_i32 : i32 to vector<1x1x256xi32>
    %22 = arith.cmpi slt, %13, %21 : vector<1x1x256xi32>
    %23 = vector.extract_strided_slice %12 {offsets = [0, 0, 0], sizes = [1, 14, 256], strides = [1, 1, 1]} : vector<1x15x256xf32> to vector<1x14x256xf32>
    %c0_i32_23 = arith.constant 0 : i32
    %24 = arith.sitofp %c0_i32_23 : i32 to f32
    %25 = vector.shape_cast %22 : vector<1x1x256xi1> to vector<1x1x256xi1>
    %26 = vector.broadcast %25 : vector<1x1x256xi1> to vector<1x14x256xi1>
    %27 = vector.broadcast %24 : f32 to vector<1x14x256xf32>
    %28 = arith.select %26, %23, %27 : vector<1x14x256xi1>, vector<1x14x256xf32>
    %c96_i32 = arith.constant 96 : i32
    %29 = vector.broadcast %c96_i32 : i32 to vector<1x1x256xi32>
    %30 = arith.cmpi slt, %13, %29 : vector<1x1x256xi32>
    %31 = vector.extract_strided_slice %12 {offsets = [0, 0, 0], sizes = [1, 13, 256], strides = [1, 1, 1]} : vector<1x15x256xf32> to vector<1x13x256xf32>
    %c0_i32_24 = arith.constant 0 : i32
    %32 = arith.sitofp %c0_i32_24 : i32 to f32
    %33 = vector.shape_cast %30 : vector<1x1x256xi1> to vector<1x1x256xi1>
    %34 = vector.broadcast %33 : vector<1x1x256xi1> to vector<1x13x256xi1>
    %35 = vector.broadcast %32 : f32 to vector<1x13x256xf32>
    %36 = arith.select %34, %31, %35 : vector<1x13x256xi1>, vector<1x13x256xf32>
    %c128_i32 = arith.constant 128 : i32
    %37 = vector.broadcast %c128_i32 : i32 to vector<1x1x256xi32>
    %38 = arith.cmpi slt, %13, %37 : vector<1x1x256xi32>
    %39 = vector.extract_strided_slice %12 {offsets = [0, 0, 0], sizes = [1, 12, 256], strides = [1, 1, 1]} : vector<1x15x256xf32> to vector<1x12x256xf32>
    %c0_i32_25 = arith.constant 0 : i32
    %40 = arith.sitofp %c0_i32_25 : i32 to f32
    %41 = vector.shape_cast %38 : vector<1x1x256xi1> to vector<1x1x256xi1>
    %42 = vector.broadcast %41 : vector<1x1x256xi1> to vector<1x12x256xi1>
    %43 = vector.broadcast %40 : f32 to vector<1x12x256xf32>
    %44 = arith.select %42, %39, %43 : vector<1x12x256xi1>, vector<1x12x256xf32>
    %c160_i32 = arith.constant 160 : i32
    %45 = vector.broadcast %c160_i32 : i32 to vector<1x1x256xi32>
    %46 = arith.cmpi slt, %13, %45 : vector<1x1x256xi32>
    %47 = vector.extract_strided_slice %12 {offsets = [0, 0, 0], sizes = [1, 11, 256], strides = [1, 1, 1]} : vector<1x15x256xf32> to vector<1x11x256xf32>
    %c0_i32_26 = arith.constant 0 : i32
    %48 = arith.sitofp %c0_i32_26 : i32 to f32
    %49 = vector.shape_cast %46 : vector<1x1x256xi1> to vector<1x1x256xi1>
    %50 = vector.broadcast %49 : vector<1x1x256xi1> to vector<1x11x256xi1>
    %51 = vector.broadcast %48 : f32 to vector<1x11x256xf32>
    %52 = arith.select %50, %47, %51 : vector<1x11x256xi1>, vector<1x11x256xf32>
    %c192_i32 = arith.constant 192 : i32
    %53 = vector.broadcast %c192_i32 : i32 to vector<1x1x256xi32>
    %54 = arith.cmpi slt, %13, %53 : vector<1x1x256xi32>
    %55 = vector.extract_strided_slice %12 {offsets = [0, 0, 0], sizes = [1, 10, 256], strides = [1, 1, 1]} : vector<1x15x256xf32> to vector<1x10x256xf32>
    %c0_i32_27 = arith.constant 0 : i32
    %56 = arith.sitofp %c0_i32_27 : i32 to f32
    %57 = vector.shape_cast %54 : vector<1x1x256xi1> to vector<1x1x256xi1>
    %58 = vector.broadcast %57 : vector<1x1x256xi1> to vector<1x10x256xi1>
    %59 = vector.broadcast %56 : f32 to vector<1x10x256xf32>
    %60 = arith.select %58, %55, %59 : vector<1x10x256xi1>, vector<1x10x256xf32>
    %c224_i32 = arith.constant 224 : i32
    %61 = vector.broadcast %c224_i32 : i32 to vector<1x1x256xi32>
    %62 = arith.cmpi slt, %13, %61 : vector<1x1x256xi32>
    %63 = vector.extract_strided_slice %12 {offsets = [0, 0, 0], sizes = [1, 9, 256], strides = [1, 1, 1]} : vector<1x15x256xf32> to vector<1x9x256xf32>
    %c0_i32_28 = arith.constant 0 : i32
    %64 = arith.sitofp %c0_i32_28 : i32 to f32
    %65 = vector.shape_cast %62 : vector<1x1x256xi1> to vector<1x1x256xi1>
    %66 = vector.broadcast %65 : vector<1x1x256xi1> to vector<1x9x256xi1>
    %67 = vector.broadcast %64 : f32 to vector<1x9x256xf32>
    %68 = arith.select %66, %63, %67 : vector<1x9x256xi1>, vector<1x9x256xf32>
    %c256_i32 = arith.constant 256 : i32
    %69 = vector.broadcast %c256_i32 : i32 to vector<1x1x256xi32>
    %70 = arith.cmpi slt, %13, %69 : vector<1x1x256xi32>
    %71 = vector.extract_strided_slice %12 {offsets = [0, 0, 0], sizes = [1, 8, 256], strides = [1, 1, 1]} : vector<1x15x256xf32> to vector<1x8x256xf32>
    %c0_i32_29 = arith.constant 0 : i32
    %72 = arith.sitofp %c0_i32_29 : i32 to f32
    %73 = vector.shape_cast %70 : vector<1x1x256xi1> to vector<1x1x256xi1>
    %74 = vector.broadcast %73 : vector<1x1x256xi1> to vector<1x8x256xi1>
    %75 = vector.broadcast %72 : f32 to vector<1x8x256xf32>
    %76 = arith.select %74, %71, %75 : vector<1x8x256xi1>, vector<1x8x256xf32>
    %77 = tpu.concatenate %20, %28, %36, %44, %52, %60, %68, %76 in 1 : vector<1x15x256xf32>, vector<1x14x256xf32>, vector<1x13x256xf32>, vector<1x12x256xf32>, vector<1x11x256xf32>, vector<1x10x256xf32>, vector<1x9x256xf32>, vector<1x8x256xf32> -> vector<1x92x256xf32>
    %c0_30 = arith.constant 0 : index
    %c0_31 = arith.constant 0 : index
    %c0_32 = arith.constant 0 : index
    %78 = vector.load %arg2[%c0_30, %c0_31, %c0_32] : memref<1x92x256xf32, #tpu.memory_space<vmem>>, vector<1x92x256xf32>
    tpu.vector_store %arg2[%c0_30, %c0_31, %c0_32], %77 {strides = array<i32>} : memref<1x92x256xf32, #tpu.memory_space<vmem>>, vector<1x92x256xf32>,
    return
  }
  func.func @transform_0(%arg0: i32) -> (i32, i32, i32) {
    %c0_i32 = arith.constant 0 : i32
    %c0_i32_0 = arith.constant 0 : i32
    %c0_i32_1 = arith.constant 0 : i32
    return %arg0, %c0_i32, %c0_i32_0 : i32, i32, i32
  }
  func.func @transform_1(%arg0: i32) -> (i32, i32, i32) {
    %c0_i32 = arith.constant 0 : i32
    %c0_i32_0 = arith.constant 0 : i32
    %c0_i32_1 = arith.constant 0 : i32
    return %arg0, %c0_i32, %c0_i32_0 : i32, i32, i32
  }
}

</mosaic_0001>

<llo_original>
// kernel: tpu_custom_call.1
$region0: #{tpu_custom_call.1}
  #allocation0 [shape = 'u32[]', space=smem, size = 0x4, offset = 0x4, fixed_abs, tag = 'smem constant byte address 0x4 - core index']
  #allocation1 [shape = 'u32[72,128]{1,0:T(1,128)}', space=vmem, size = 0x9000, scoped, tag = 'internal scratch']
  #allocation2 [shape = 'f32[1,23,32]{2,1,0:T(8,128)}', space=vmem, size = 0x3000, scoped, tag = 'scratch operand']
  %s0 = inlined_call_operand.hbm [shape: f32[2,16,32], index: 0, kind: input, shape index: {}]
  %s1 = inlined_call_operand.vmem [shape: f32[2,92,256], index: 1, kind: output, shape index: {}]
  %s2 = sld [smem:[#allocation0]]
  $region41: #{tpu_custom_call.1} parent=0
    _
  %s4 = ssub.s32 1, %s2
  %s5 = scalar_select 0, %s4, %s2
  $region1: #{tpu_custom_call.1} parent=0
    #allocation3 [shape = 'u8[16384]{0}', space=vmem, size = 0x4000, scoped, tag = 'input window, operand 0']
    #allocation4 [shape = 's32[2]{0}', space=sflag, size = 0x8, scoped, tag = 'scoped memory for tpu_custom_call.1']
    %6 = vsyncpa [#allocation4], 0
    %s7 = scalar_lea.sflag [#allocation4], 1
    %8 = vsyncpa %s7, 0
    loop: start=0, step=1, limit=4
    $region2: #{tpu_custom_call.1} parent=1 // loop_pre_header
      _
    $region3: #{tpu_custom_call.1} parent=1 // loop_header
      %s10 = sphi 0, %s14
      %p11 = scmp.ge.s32.totalorder %s10, 4
      %s20 = sphi 0, %s22
      %s23 = sphi 0, %s20
      %s24 = sphi 0, %s23
      %s40 = sphi 0, %s24
      %s46 = sphi 0, %s48
      %s49 = sphi 0, %s46
      %s50 = sphi 0, %s49
      %s66 = sphi 0, %s50
    $region4: #{tpu_custom_call.1} parent=1 // loop_header_branch
      %13 = sbr.rel (%p11) target = $region8
    $region5: #{tpu_custom_call.1} parent=1 // loop_body
      %s15 = ssub.s32 %s10, 1
      %s16 = ssub.s32 %s10, 2
      %s17 = sadd.s32 %s10, 1
      %s18 = ssub.s32 %s10, %s17
      %p19 = scmp.eq.s32.totalorder %s18, 0
      %s21 = sadd.s32 %s20, 1
      %s22 = scalar_select %p19, %s20, %s21
      %p25 = pneg %p19
      %p26 = scmp.eq.s32.totalorder %s10, 1
      %p27 = por %p25, %p26
      %p28 = scmp.ne.s32.totalorder %s20, %s23
      %p29 = scmp.eq.s32.totalorder %s10, 0
      %p30 = por %p28, %p29
      %p31 = scmp.ne.s32.totalorder %s20, %s23
      %p32 = scmp.eq.s32.totalorder %s15, 1
      %p33 = por %p31, %p32
      %p34 = scmp.ne.s32.totalorder %s23, %s24
      %p35 = scmp.eq.s32.totalorder %s15, 0
      %p36 = por %p34, %p35
      %p37 = scmp.ne.s32.totalorder %s23, %s24
      %p38 = scmp.eq.s32.totalorder %s16, 1
      %p39 = por %p37, %p38
      %p41 = scmp.ne.s32.totalorder %s24, %s40
      %p42 = scmp.eq.s32.totalorder %s16, 0
      %p43 = por %p41, %p42
      %s44 = ssub.s32 %s10, %s17
      %p45 = scmp.eq.s32.totalorder %s44, 0
      %s47 = sadd.s32 %s46, 1
      %s48 = scalar_select %p45, %s46, %s47
      %p51 = pneg %p45
      %p52 = scmp.eq.s32.totalorder %s10, 1
      %p53 = por %p51, %p52
      %p54 = scmp.ne.s32.totalorder %s46, %s49
      %p55 = scmp.eq.s32.totalorder %s10, 0
      %p56 = por %p54, %p55
      %p57 = scmp.ne.s32.totalorder %s46, %s49
      %p58 = scmp.eq.s32.totalorder %s15, 1
      %p59 = por %p57, %p58
      %p60 = scmp.ne.s32.totalorder %s49, %s50
      %p61 = scmp.eq.s32.totalorder %s15, 0
      %p62 = por %p60, %p61
      %p63 = scmp.ne.s32.totalorder %s49, %s50
      %p64 = scmp.eq.s32.totalorder %s16, 1
      %p65 = por %p63, %p64
      %p67 = scmp.ne.s32.totalorder %s50, %s66
      %p68 = scmp.eq.s32.totalorder %s16, 0
      %p69 = por %p67, %p68
      %p70 = scmp.le.s32.totalorder 1, %s10
      %p71 = scmp.lt.s32.totalorder %s10, 3
      %p72 = pnand %p70, %p71
      %p73 = pneg %p72
      // Predicated region
      $region9: #{tpu_custom_call.1} parent=5 // pred_check
        _
      $region10: #{tpu_custom_call.1} parent=5 // pred_check_branch
        %75 = sbr.rel (%p72) target = $region12
      $region11: #{tpu_custom_call.1} parent=5 // pred_region
        %s76 = ssub.s32 %s10, 1
      $region12: #{tpu_custom_call.1} parent=5 // pred_fallthru
        _
      %p77 = scmp.lt.s32.totalorder %s10, 2
      // Predicated region
      $region13: #{tpu_custom_call.1} parent=5 // pred_check
        %p78 = pneg %p77
      $region14: #{tpu_custom_call.1} parent=5 // pred_check_branch
        %80 = sbr.rel (%p78) target = $region16
      $region15: #{tpu_custom_call.1} parent=5 // pred_region
        // Predicated region
        $region17: #{tpu_custom_call.1} parent=15 // pred_check
          %p81 = pneg %p30
        $region18: #{tpu_custom_call.1} parent=15 // pred_check_branch
          %83 = sbr.rel (%p81) target = $region20
        $region19: #{tpu_custom_call.1} parent=15 // pred_region
          %s84 = sand.u32 %s20, 1
          %s85 = scalar_lea.sflag [#allocation4], %s84
          %s86 = sand.u32 %s20, 1
          %s87 = smul.addr %s86, 16
          %s88 = scalar_lea.vmem [#allocation3], %s87
          %90 = vsyncadd %s85, 0
          %s91 = smul.addr %s10, 2
          %s92 = smul.addr %s91, 8
          %s93 = scalar_lea.hbm %s0, %s92
          %s94 = sshll.u32 %s93, 4
          %s95 = int_to_ptr.hbm [resolvable:$true] %s94
          %s96 = sshll.u32 %s88, 4
          %s97 = int_to_ptr.vmem [resolvable:$true] %s96
          %102 = dma.hbm_to_vmem [thread:$0]  %s95, 256, %s97, %s85, 128, 128, 8
        $region20: #{tpu_custom_call.1} parent=15 // pred_fallthru
          _
      $region16: #{tpu_custom_call.1} parent=5 // pred_fallthru
        _
      %p103 = scmp.le.s32.totalorder 1, %s10
      %p104 = scmp.lt.s32.totalorder %s10, 3
      %p105 = pnand %p103, %p104
      %p106 = pneg %p105
      // Predicated region
      $region21: #{tpu_custom_call.1} parent=5 // pred_check
        _
      $region22: #{tpu_custom_call.1} parent=5 // pred_check_branch
        %108 = sbr.rel (%p105) target = $region24
      $region23: #{tpu_custom_call.1} parent=5 // pred_region
        %s109 = ssub.s32 %s10, 1
        %s110 = sand.u32 %s23, 1
        %s111 = scalar_lea.sflag [#allocation4], %s110
        %s112 = sand.u32 %s23, 1
        %s113 = smul.addr %s112, 16
        %s114 = scalar_lea.vmem [#allocation3], %s113
        // Predicated region
        $region25: #{tpu_custom_call.1} parent=23 // pred_check
          %p115 = pneg %p36
        $region26: #{tpu_custom_call.1} parent=23 // pred_check_branch
          %117 = sbr.rel (%p115) target = $region28
        $region27: #{tpu_custom_call.1} parent=23 // pred_region
          %119 = dma.done %s111, 256
        $region28: #{tpu_custom_call.1} parent=23 // pred_fallthru
          _
        %s120 = sand.u32 %s23, 1
        %s121 = scalar_lea.sflag [#allocation4], %s120
        %s122 = sand.u32 %s23, 1
        %s123 = smul.addr %s122, 16
        %s124 = scalar_lea.vmem [#allocation3], %s123
        %p125 = pneg %p36
        %p126 = pneg %p33
        %p127 = pneg %p62
        %p128 = pneg %p59
        %p129 = scmp.lt.s32.totalorder %s15, 1
        %s130 = scalar_select %p129, %s15, 1
        %s131 = smul.addr %s130, 24
        %s132 = smul.addr %s131, 8
        %s133 = scalar_lea.vmem %s1, %s132
        %p134 = scmp.lt.s32.totalorder %s15, 1
        %s135 = scalar_select %p134, %s15, 1
        %s136 = smul.addr %s135, 24
        %s137 = smul.addr %s136, 8
        %s138 = scalar_lea.vmem %s1, %s137
        %vm139 = vcmask 260096
        %140 = vst.msk [vmem:[#allocation2 + $0x10] sm:$0x7f] %vm139, 0.0
        %v141 = vld [vmem:[%s114] sm:$0xff]
        %v142 = vld [vmem:[%s114 + $0x8] sm:$0xff]
        %vm143 = vcmask 261120
        %144 = vst.msk [vmem:[#allocation2] sm:$0xff] %vm143, %v141
        %145 = vst.msk [vmem:[#allocation2 + $0x8] sm:$0xff] %vm143, %v142
        %v146 = vld [vmem:[#allocation2 + $0x1] sm:$0xff]
        %v147 = vld [vmem:[#allocation2 + $0x9] sm:$0x7f]
        %v148 = vld [vmem:[#allocation2 + $0x2] sm:$0xff]
        %v149 = vld [vmem:[#allocation2 + $0xa] sm:$0x7f]
        %v150 = vld [vmem:[#allocation2 + $0x3] sm:$0xff]
        %v151 = vld [vmem:[#allocation2 + $0xb] sm:$0x7f]
        %v152 = vld [vmem:[#allocation2 + $0x4] sm:$0xff]
        %v153 = vld [vmem:[#allocation2 + $0xc] sm:$0x7f]
        %v154 = vld [vmem:[#allocation2 + $0x5] sm:$0xff]
        %v155 = vld [vmem:[#allocation2 + $0xd] sm:$0x7f]
        %v156 = vld [vmem:[#allocation2 + $0x6] sm:$0xff]
        %v157 = vld [vmem:[#allocation2 + $0xe] sm:$0x7f]
        %v158 = vld [vmem:[#allocation2 + $0x7] sm:$0xff]
        %v159 = vld [vmem:[#allocation2 + $0xf] sm:$0x7f]
        %v160 = vld [vmem:[#allocation2 + $0x8] sm:$0xff]
        %v161 = vld [vmem:[#allocation2 + $0x10] sm:$0x7f]
        %164 = vrot.lane.b32.xlu0 %v148, 32
        %v165 = vpop.permute.xlu0 %164
        %166 = vrot.lane.b32.xlu0 %v149, 32
        %v167 = vpop.permute.xlu0 %166
        %172 = vrot.lane.b32.xlu0 %v150, 64
        %v173 = vpop.permute.xlu0 %172
        %174 = vrot.lane.b32.xlu0 %v151, 64
        %v175 = vpop.permute.xlu0 %174
        %180 = vrot.lane.b32.xlu0 %v152, 96
        %v181 = vpop.permute.xlu0 %180
        %182 = vrot.lane.b32.xlu0 %v153, 96
        %v183 = vpop.permute.xlu0 %182
        %188 = vrot.lane.b32.xlu0 %v156, 32
        %v189 = vpop.permute.xlu0 %188
        %190 = vrot.lane.b32.xlu0 %v157, 32
        %v191 = vpop.permute.xlu0 %190
        %196 = vrot.lane.b32.xlu0 %v158, 64
        %v197 = vpop.permute.xlu0 %196
        %198 = vrot.lane.b32.xlu0 %v159, 64
        %v199 = vpop.permute.xlu0 %198
        %204 = vrot.lane.b32.xlu0 %v160, 96
        %v205 = vpop.permute.xlu0 %204
        %206 = vrot.lane.b32.xlu0 %v161, 96
        %v207 = vpop.permute.xlu0 %206
        %v210 = vsel %vm143, %v146, %v165
        %v211 = vsel %vm143, %v147, %v167
        %vm212 = vcmask 523264
        %v213 = vsel %vm212, %v210, %v173
        %v214 = vsel %vm212, %v211, %v175
        %vm215 = vcmask 785408
        %v216 = vsel %vm215, %v213, %v181
        %v217 = vsel %vm215, %v214, %v183
        %v218 = vsel %vm143, %v154, %v189
        %v219 = vsel %vm143, %v155, %v191
        %v220 = vsel %vm212, %v218, %v197
        %v221 = vsel %vm212, %v219, %v199
        %v222 = vsel %vm215, %v220, %v205
        %v223 = vsel %vm215, %v221, %v207
        %v224 = vlaneseq
        %v225 = vand.u32 %v224, 127
        %v226 = vadd.s32 %v225, 128
        %vm227 = vcmp.lt.s32.totalorder %v225, 32
        %vm228 = vcmp.lt.s32.totalorder %v226, 32
        %v229 = vsel %vm227, 1, 0
        %v230 = vsel %vm228, 1, 0
        %vm231 = vcmp.eq.s32.totalorder %v229, 1
        %vm232 = vcmp.eq.s32.totalorder %v230, 1
        %v233 = vsel %vm231, %v216, 0.0
        %v234 = vsel %vm232, %v222, 0.0
        %v235 = vsel %vm231, %v217, 0.0
        %v236 = vsel %vm232, %v223, 0.0
        %vm237 = vcmp.lt.s32.totalorder %v225, 64
        %vm238 = vcmp.lt.s32.totalorder %v226, 64
        %v239 = vsel %vm237, 1, 0
        %v240 = vsel %vm238, 1, 0
        %vm241 = vcmp.eq.s32.totalorder %v239, 1
        %vm242 = vcmp.eq.s32.totalorder %v240, 1
        %v243 = vsel %vm241, %v216, 0.0
        %v244 = vsel %vm242, %v222, 0.0
        %v245 = vsel %vm241, %v217, 0.0
        %v246 = vsel %vm242, %v223, 0.0
        %vm247 = vcmp.lt.s32.totalorder %v225, 96
        %vm248 = vcmp.lt.s32.totalorder %v226, 96
        %v249 = vsel %vm247, 1, 0
        %v250 = vsel %vm248, 1, 0
        %vm251 = vcmp.eq.s32.totalorder %v249, 1
        %vm252 = vcmp.eq.s32.totalorder %v250, 1
        %v253 = vsel %vm251, %v216, 0.0
        %v254 = vsel %vm252, %v222, 0.0
        %v255 = vsel %vm251, %v217, 0.0
        %v256 = vsel %vm252, %v223, 0.0
        %vm257 = vcmp.lt.s32.totalorder %v225, 128
        %vm258 = vcmp.lt.s32.totalorder %v226, 128
        %v259 = vsel %vm257, 1, 0
        %v260 = vsel %vm258, 1, 0
        %vm261 = vcmp.eq.s32.totalorder %v259, 1
        %vm262 = vcmp.eq.s32.totalorder %v260, 1
        %v263 = vsel %vm261, %v216, 0.0
        %v264 = vsel %vm262, %v222, 0.0
        %v265 = vsel %vm261, %v217, 0.0
        %v266 = vsel %vm262, %v223, 0.0
        %vm267 = vcmp.lt.s32.totalorder %v225, 160
        %vm268 = vcmp.lt.s32.totalorder %v226, 160
        %v269 = vsel %vm267, 1, 0
        %v270 = vsel %vm268, 1, 0
        %vm271 = vcmp.eq.s32.totalorder %v269, 1
        %vm272 = vcmp.eq.s32.totalorder %v270, 1
        %v273 = vsel %vm271, %v216, 0.0
        %v274 = vsel %vm272, %v222, 0.0
        %v275 = vsel %vm271, %v217, 0.0
        %v276 = vsel %vm272, %v223, 0.0
        %vm277 = vcmp.lt.s32.totalorder %v225, 192
        %vm278 = vcmp.lt.s32.totalorder %v226, 192
        %v279 = vsel %vm277, 1, 0
        %v280 = vsel %vm278, 1, 0
        %vm281 = vcmp.eq.s32.totalorder %v279, 1
        %vm282 = vcmp.eq.s32.totalorder %v280, 1
        %v283 = vsel %vm281, %v216, 0.0
        %v284 = vsel %vm282, %v222, 0.0
        %v285 = vsel %vm281, %v217, 0.0
        %v286 = vsel %vm282, %v223, 0.0
        %vm287 = vcmp.lt.s32.totalorder %v225, 224
        %vm288 = vcmp.lt.s32.totalorder %v226, 224
        %v289 = vsel %vm287, 1, 0
        %v290 = vsel %vm288, 1, 0
        %vm291 = vcmp.eq.s32.totalorder %v289, 1
        %vm292 = vcmp.eq.s32.totalorder %v290, 1
        %v293 = vsel %vm291, %v216, 0.0
        %v294 = vsel %vm292, %v222, 0.0
        %v295 = vsel %vm291, %v217, 0.0
        %v296 = vsel %vm292, %v223, 0.0
        %vm297 = vcmp.lt.s32.totalorder %v225, 256
        %vm298 = vcmp.lt.s32.totalorder %v226, 256
        %v299 = vsel %vm297, 1, 0
        %v300 = vsel %vm298, 1, 0
        %vm301 = vcmp.eq.s32.totalorder %v299, 1
        %vm302 = vcmp.eq.s32.totalorder %v300, 1
        %v303 = vsel %vm301, %v216, 0.0
        %v304 = vsel %vm302, %v222, 0.0
        %vm309 = vcmask 1046528
        %v310 = vrot.slane %v243, 1
        %v311 = vrot.slane %v244, 1
        %v312 = vrot.slane %v245, 1
        %v313 = vsel %vm309, %v310, %v312
        %v314 = vrot.slane %v246, 1
        %v315 = vsel %vm309, %v311, %v314
        %vm326 = vcmask 1044480
        %v327 = vrot.slane %v253, 3
        %v328 = vrot.slane %v254, 3
        %v329 = vrot.slane %v255, 3
        %v330 = vsel %vm326, %v327, %v329
        %v331 = vrot.slane %v256, 3
        %v332 = vsel %vm326, %v328, %v331
        %vm343 = vcmask 1041408
        %v344 = vrot.slane %v263, 6
        %v345 = vrot.slane %v264, 6
        %v346 = vrot.slane %v265, 6
        %v347 = vsel %vm343, %v344, %v346
        %v348 = vrot.slane %v266, 6
        %v349 = vsel %vm343, %v345, %v348
        %vm358 = vcmask 1045504
        %v359 = vrot.slane %v273, 2
        %v360 = vrot.slane %v274, 2
        %v361 = vrot.slane %v275, 2
        %v362 = vsel %vm358, %v359, %v361
        %v363 = vrot.slane %v276, 2
        %v364 = vsel %vm358, %v360, %v363
        %vm375 = vcmask 1040384
        %v376 = vrot.slane %v283, 7
        %v377 = vrot.slane %v284, 7
        %v378 = vrot.slane %v285, 7
        %v379 = vsel %vm375, %v376, %v378
        %v380 = vrot.slane %v286, 7
        %v381 = vsel %vm375, %v377, %v380
        %vm390 = vcmask 1042432
        %v391 = vrot.slane %v293, 5
        %v392 = vrot.slane %v294, 5
        %v393 = vrot.slane %v295, 5
        %v394 = vsel %vm390, %v391, %v393
        %v395 = vrot.slane %v296, 5
        %v396 = vsel %vm390, %v392, %v395
        %v403 = vrot.slane %v303, 4
        %v404 = vrot.slane %v304, 4
        %v407 = vsel %vm309, %v235, %v310
        %v408 = vsel %vm309, %v236, %v311
        %v409 = vsel %vm326, %v312, %v327
        %v410 = vsel %vm326, %v314, %v328
        %v411 = vsel %vm343, %v329, %v344
        %v412 = vsel %vm343, %v331, %v345
        %v413 = vsel %vm358, %v347, %v359
        %v414 = vsel %vm358, %v349, %v360
        %v415 = vsel %vm375, %v361, %v376
        %v416 = vsel %vm375, %v363, %v377
        %v417 = vsel %vm390, %v379, %v391
        %v418 = vsel %vm390, %v381, %v392
        %vm419 = vcmask 1043456
        %v420 = vsel %vm419, %v394, %v403
        %v421 = vsel %vm419, %v396, %v404
        %422 = vst [vmem:[%s138] sm:$0xff] %v233
        %423 = vst [vmem:[%s138 + $0x8] sm:$0xff] %v234
        %424 = vst [vmem:[%s138 + $0x10] sm:$0xff] %v407
        %425 = vst [vmem:[%s138 + $0x18] sm:$0xff] %v408
        %426 = vst [vmem:[%s138 + $0x20] sm:$0xff] %v313
        %427 = vst [vmem:[%s138 + $0x28] sm:$0xff] %v315
        %428 = vst [vmem:[%s138 + $0x30] sm:$0xff] %v409
        %429 = vst [vmem:[%s138 + $0x38] sm:$0xff] %v410
        %430 = vst [vmem:[%s138 + $0x40] sm:$0xff] %v330
        %431 = vst [vmem:[%s138 + $0x48] sm:$0xff] %v332
        %432 = vst [vmem:[%s138 + $0x50] sm:$0xff] %v411
        %433 = vst [vmem:[%s138 + $0x58] sm:$0xff] %v412
        %434 = vst [vmem:[%s138 + $0x60] sm:$0xff] %v413
        %435 = vst [vmem:[%s138 + $0x68] sm:$0xff] %v414
        %436 = vst [vmem:[%s138 + $0x70] sm:$0xff] %v362
        %437 = vst [vmem:[%s138 + $0x78] sm:$0xff] %v364
        %438 = vst [vmem:[%s138 + $0x80] sm:$0xff] %v415
        %439 = vst [vmem:[%s138 + $0x88] sm:$0xff] %v416
        %440 = vst [vmem:[%s138 + $0x90] sm:$0xff] %v417
        %441 = vst [vmem:[%s138 + $0x98] sm:$0xff] %v418
        %442 = vst [vmem:[%s138 + $0xa0] sm:$0xff] %v420
        %443 = vst [vmem:[%s138 + $0xa8] sm:$0xff] %v421
        %444 = vst [vmem:[%s138 + $0xb0] sm:$0xf] %v403
        %445 = vst [vmem:[%s138 + $0xb8] sm:$0xf] %v404
        %p446 = scmp.lt.s32.totalorder %s15, 1
        %s447 = scalar_select %p446, %s15, 1
        %s448 = smul.addr %s447, 24
        %s449 = smul.addr %s448, 8
        %s450 = scalar_lea.vmem %s1, %s449
        // Predicated region
        $region29: #{tpu_custom_call.1} parent=23 // pred_check
          %p451 = pneg %p59
        $region30: #{tpu_custom_call.1} parent=23 // pred_check_branch
          %453 = sbr.rel (%p451) target = $region32
        $region31: #{tpu_custom_call.1} parent=23 // pred_region
          _
        $region32: #{tpu_custom_call.1} parent=23 // pred_fallthru
          _
      $region24: #{tpu_custom_call.1} parent=5 // pred_fallthru
        _
      %p454 = scmp.le.s32.totalorder 2, %s10
      // Predicated region
      $region33: #{tpu_custom_call.1} parent=5 // pred_check
        %p455 = pneg %p454
      $region34: #{tpu_custom_call.1} parent=5 // pred_check_branch
        %457 = sbr.rel (%p455) target = $region36
      $region35: #{tpu_custom_call.1} parent=5 // pred_region
        %s458 = ssub.s32 %s10, 2
        // Predicated region
        $region37: #{tpu_custom_call.1} parent=35 // pred_check
          %p459 = pneg %p65
        $region38: #{tpu_custom_call.1} parent=35 // pred_check_branch
          %461 = sbr.rel (%p459) target = $region40
        $region39: #{tpu_custom_call.1} parent=35 // pred_region
          %p462 = scmp.lt.s32.totalorder %s16, 1
          %s463 = scalar_select %p462, %s16, 1
          %s464 = smul.addr %s463, 24
          %s465 = smul.addr %s464, 8
          %s466 = scalar_lea.vmem %s1, %s465
        $region40: #{tpu_custom_call.1} parent=35 // pred_fallthru
          _
      $region36: #{tpu_custom_call.1} parent=5 // pred_fallthru
        _
    $region6: #{tpu_custom_call.1} parent=1 // loop_footer
      %s14 = sadd.s32 1, %s10
    $region7: #{tpu_custom_call.1} parent=1 // loop_footer_branch
      %9 = sbr.rel target = $region3
    $region8: #{tpu_custom_call.1} parent=1 // loop_exit
      _
    %467 = vsyncpa [#allocation4], 1
    %s468 = scalar_lea.sflag [#allocation4], 1
    %469 = vsyncpa %s468, 1

</llo_original>
